<compile_context>
chip_gen: v7x
topology: tpu7x:2x2x1
jax: 0.10.0
libtpu: 0.0.40
codegen_flags: <defaults>
</compile_context>

<pallas_src>
import jax
import jax.numpy as jnp
from jax import lax
from jax.experimental import pallas as pl
from jax.experimental.pallas import tpu as pltpu


# ----------------------------------------------------------------------------
# Helpers
# ----------------------------------------------------------------------------
def _row_tile(n):
  for t in (512, 256, 128, 64, 32, 16, 8):
    if n % t == 0:
      return t
  return n


def _time_chunk(t):
  for c in (16, 8, 4, 2):
    if t % c == 0:
      return c
  return 1


# ----------------------------------------------------------------------------
# Pallas kernels
# ----------------------------------------------------------------------------
def _proj_kernel(x_ref, w_ref, b_ref, o_ref):
  """o[r] = bias + sum_p x[p, r] @ w[p].  Grid = (row_tiles, parts)."""
  @pl.when(pl.program_id(1) == 0)
  def _():
    o_ref[...] = jnp.broadcast_to(b_ref[...], o_ref.shape)
  o_ref[...] += jnp.dot(x_ref[...].astype(jnp.bfloat16), w_ref[...],
                        preferred_element_type=jnp.float32)


def _bidir_lstm_kernel(len_ref, gin_ref, whh_ref, out_ref, h_sc, c_sc):
  """Fused bidirectional LSTM recurrence.

  Grid = (direction, time_chunk).  gates_in already contains x@W_ih + biases
  for this direction; the kernel only does the serial h@W_hh part.  Packed-
  sequence semantics: padded steps keep state and emit zeros.
  """
  d = pl.program_id(0)                  # 0 = forward, 1 = backward
  t = pl.program_id(1)
  n_chunks = pl.num_programs(1)
  Tc = gin_ref.shape[0]
  H = h_sc.shape[1]

  @pl.when(t == 0)
  def _():
    h_sc[...] = jnp.zeros_like(h_sc)
    c_sc[...] = jnp.zeros_like(c_sc)

  # chunk index in global (forward) time order: fwd -> t, bwd -> n_chunks-1-t
  chunk = t + d * (n_chunks - 1 - 2 * t)
  len_col = len_ref[...]                # (B, 1) int32 sequence lengths
  whh = whh_ref[...]                    # (H, 4H) bf16

  def step(i, carry):
    li = jnp.where(d == 0, i, Tc - 1 - i)       # local time index in chunk
    gt = chunk * Tc + li                        # global time index
    gates = gin_ref[li] + jnp.dot(h_sc[...].astype(jnp.bfloat16), whh,
                                  preferred_element_type=jnp.float32)
    # TODO(synk): gate slices are 32-lane sub-tiles of a 128-lane vreg (H=32);
    # lane-aligned gate layout would help at production H.
    i_g = jax.nn.sigmoid(gates[:, 0 * H:1 * H])
    f_g = jax.nn.sigmoid(gates[:, 1 * H:2 * H])
    g_g = jnp.tanh(gates[:, 2 * H:3 * H])
    o_g = jax.nn.sigmoid(gates[:, 3 * H:4 * H])
    c_new = f_g * c_sc[...] + i_g * g_g
    h_new = o_g * jnp.tanh(c_new)
    live = gt < len_col                         # (B, 1) packed-sequence mask
    c_sc[...] = jnp.where(live, c_new, c_sc[...])
    h_sc[...] = jnp.where(live, h_new, h_sc[...])
    out_ref[li] = jnp.where(live, h_new, jnp.zeros_like(h_new))
    return carry

  lax.fori_loop(0, Tc, step, 0, unroll=True)


# ----------------------------------------------------------------------------
# Wrappers
# ----------------------------------------------------------------------------
def linear_proj(x_parts, w_parts, bias):
  """x_parts: (P, N, F) f32, w_parts: (P, F, O) bf16, bias: (1, O) f32 -> (N, O)."""
  P, N, F = x_parts.shape
  O = w_parts.shape[2]
  tr = _row_tile(N)
  return pl.pallas_call(
      _proj_kernel,
      out_shape=jax.ShapeDtypeStruct((N, O), jnp.float32),
      grid_spec=pltpu.PrefetchScalarGridSpec(
          num_scalar_prefetch=0,
          grid=(N // tr, P),                          # parts (reduction) last
          in_specs=[
              pl.BlockSpec((None, tr, F), lambda r, p: (p, r, 0)),
              pl.BlockSpec((None, F, O), lambda r, p: (p, 0, 0)),
              pl.BlockSpec((1, O), lambda r, p: (0, 0)),
          ],
          out_specs=pl.BlockSpec((tr, O), lambda r, p: (r, 0)),
      ),
      compiler_params=pltpu.CompilerParams(
          dimension_semantics=("parallel", "arbitrary")),
  )(x_parts, w_parts, bias)


def bidir_lstm_layer(gates_in, src_len_2d, whh, *, Tc):
  """gates_in: (T, B, 8H) f32 (both directions), whh: (2, H, 4H) bf16.

  Returns (2, T, B, H): [forward hidden states, backward hidden states],
  both in natural time order, zeros at padded steps.
  """
  T, B, _ = gates_in.shape
  H = whh.shape[1]
  n_chunks = T // Tc

  def gin_map(d, t):
    c = t + d * (n_chunks - 1 - 2 * t)     # fwd: t, bwd: reversed chunk order
    return (c, 0, d)                       # lane block d selects this dir's 4H

  def out_map(d, t):
    c = t + d * (n_chunks - 1 - 2 * t)
    return (d, c, 0, 0)

  return pl.pallas_call(
      _bidir_lstm_kernel,
      out_shape=jax.ShapeDtypeStruct((2, T, B, H), jnp.float32),
      grid_spec=pltpu.PrefetchScalarGridSpec(
          num_scalar_prefetch=0,
          grid=(2, n_chunks),
          in_specs=[
              pl.BlockSpec((B, 1), lambda d, t: (0, 0)),           # src_len
              pl.BlockSpec((Tc, B, 4 * H), gin_map),               # gate pre-acts
              pl.BlockSpec((None, H, 4 * H), lambda d, t: (d, 0, 0)),  # W_hh
          ],
          out_specs=pl.BlockSpec((None, Tc, B, H), out_map),
          scratch_shapes=[pltpu.VMEM((B, H), jnp.float32),          # h state
                          pltpu.VMEM((B, H), jnp.float32)],         # c state
      ),
      compiler_params=pltpu.CompilerParams(
          # direction axis splits across the 2 TensorCores on v7x
          dimension_semantics=("parallel", "arbitrary")),
  )(src_len_2d, gates_in, whh)


def bilstm_crf_forward(src, src_len, params, cfg):
  """src: (B, T) int32, src_len: (B,) int32 -> feats (B, T, label_number+2)."""
  B, T = src.shape
  H = cfg["lstm_hidden"]
  O = cfg["label_number"] + 2
  Tc = _time_chunk(T)

  # TODO(synk): embedding gather stays in XLA (no rectangular-tile access
  # pattern); the (B,T)->(T,B) transpose is folded into the gather indices.
  x = jnp.take(params["embedding"], src.T, axis=0).astype(jnp.float32)  # (T,B,E)
  src_len_2d = src_len.astype(jnp.int32).reshape(B, 1)

  def run_stack(parts, layers):
    # parts: (P, T*B, F) "split" bidirectional activations (never concatenated)
    for lp in layers:
      gates = linear_proj(parts, lp["wih"], lp["bias"])         # (T*B, 8H)
      h = bidir_lstm_layer(gates.reshape(T, B, 8 * H), src_len_2d,
                           lp["whh"], Tc=Tc)                    # (2, T, B, H)
      parts = h.reshape(2, T * B, H)
      # inter-layer nn.LSTM dropout is identity in eval mode
    return parts

  enc = run_stack(x.reshape(1, T * B, -1), params["encoder"])   # (2, T*B, H)
  dec = run_stack(enc, params["decoder"])                       # (2, T*B, H)

  # droplayer (nn.Dropout) is identity in eval mode
  feats_pad = linear_proj(dec, params["lin_w"], params["lin_b"])  # (T*B, 128)
  feats = feats_pad[:, :O].reshape(T, B, O)
  return jnp.transpose(feats, (1, 0, 2))                        # (B, T, O)


# ----------------------------------------------------------------------------
# Pure-JAX reference (same math / same bf16 operand casts)
# ----------------------------------------------------------------------------
def _ref_dot(a, b):
  return jnp.dot(a.astype(jnp.bfloat16), b.astype(jnp.bfloat16),
                 preferred_element_type=jnp.float32)


def _forward_ref(src, src_len, params, cfg):
  B, T = src.shape
  H = cfg["lstm_hidden"]
  O = cfg["label_number"] + 2
  x = jnp.take(params["embedding"], src.T, axis=0).astype(jnp.float32)
  mask = ((jnp.arange(T)[:, None] < src_len[None, :])
          .astype(jnp.float32)[:, :, None])                     # (T, B, 1)

  def run_dir(gin, whh, reverse):
    def step(carry, t):
      h, c = carry
      g = gin[t] + _ref_dot(h, whh)
      i_g = jax.nn.sigmoid(g[:, :H]); f_g = jax.nn.sigmoid(g[:, H:2 * H])
      g_g = jnp.tanh(g[:, 2 * H:3 * H]); o_g = jax.nn.sigmoid(g[:, 3 * H:])
      c_new = f_g * c + i_g * g_g
      h_new = o_g * jnp.tanh(c_new)
      m = mask[t]
      return ((jnp.where(m > 0, h_new, h), jnp.where(m > 0, c_new, c)),
              jnp.where(m > 0, h_new, jnp.zeros_like(h_new)))
    idx = jnp.arange(T - 1, -1, -1) if reverse else jnp.arange(T)
    _, outs = lax.scan(step, (jnp.zeros((B, H)), jnp.zeros((B, H))), idx)
    return outs[::-1] if reverse else outs

  def run_stack(parts, layers):
    for lp in layers:
      gin = sum(_ref_dot(parts[p], lp["wih"][p])
                for p in range(parts.shape[0])) + lp["bias"]
      gin = gin.reshape(T, B, 8 * H)
      f = run_dir(gin[..., :4 * H], lp["whh"][0], False)
      b = run_dir(gin[..., 4 * H:], lp["whh"][1], True)
      parts = jnp.stack([f, b]).reshape(2, T * B, H)
    return parts

  dec = run_stack(run_stack(x.reshape(1, T * B, -1), params["encoder"]),
                  params["decoder"])
  feats = sum(_ref_dot(dec[p], params["lin_w"][p]) for p in range(2))
  feats = feats + params["lin_b"]
  return jnp.transpose(feats[:, :O].reshape(T, B, O), (1, 0, 2))


# ----------------------------------------------------------------------------
# Deterministic parameter construction (PyTorch LSTM/Linear init, repacked)
# ----------------------------------------------------------------------------
def _make_lstm_params(key, num_layers, input_size, hidden, first_input_parts):
  H = hidden
  scale = 1.0 / (H ** 0.5)
  layers = []
  for l in range(num_layers):
    in_sz = input_size if l == 0 else 2 * H
    parts = first_input_parts if l == 0 else 2
    raw = {}
    for tag in ("f", "b"):
      key, k1, k2, k3, k4 = jax.random.split(key, 5)
      raw[f"w_ih_{tag}"] = jax.random.uniform(k1, (4 * H, in_sz), jnp.float32,
                                              -scale, scale)
      raw[f"w_hh_{tag}"] = jax.random.uniform(k2, (4 * H, H), jnp.float32,
                                              -scale, scale)
      raw[f"bias_{tag}"] = (
          jax.random.uniform(k3, (4 * H,), jnp.float32, -scale, scale) +
          jax.random.uniform(k4, (4 * H,), jnp.float32, -scale, scale))
    # combined input-projection weight: columns = [fwd 4H gates | bwd 4H gates]
    wih_cat = jnp.concatenate([raw["w_ih_f"].T, raw["w_ih_b"].T], axis=1)
    if parts == 1:
      wih = wih_cat[None]                                   # (1, in_sz, 8H)
    else:
      wih = jnp.stack([wih_cat[:H], wih_cat[H:]])           # (2, H, 8H)
    whh = jnp.stack([raw["w_hh_f"].T, raw["w_hh_b"].T])     # (2, H, 4H)
    bias = jnp.concatenate([raw["bias_f"], raw["bias_b"]]).reshape(1, 8 * H)
    layers.append({"wih": wih.astype(jnp.bfloat16),
                   "whh": whh.astype(jnp.bfloat16),
                   "bias": bias})
  return key, layers


def make_params(key, cfg):
  H, E = cfg["lstm_hidden"], cfg["embed_size"]
  O = cfg["label_number"] + 2
  O_pad = ((O + 127) // 128) * 128                          # lane-dense output
  key, ke = jax.random.split(key)
  emb = jax.random.normal(ke, (cfg["vocab_len"], E), jnp.float32)
  key, enc = _make_lstm_params(key, cfg["lstm_layers"], E, H,
                               first_input_parts=1)
  key, dec = _make_lstm_params(key, cfg["lstm_layers"], 2 * H, H,
                               first_input_parts=2)
  kl = 1.0 / ((2 * H) ** 0.5)
  key, kw, kb = jax.random.split(key, 3)
  lin_w = jax.random.uniform(kw, (O, 2 * H), jnp.float32, -kl, kl)
  lin_b = jax.random.uniform(kb, (O,), jnp.float32, -kl, kl)
  w_pad = jnp.zeros((2 * H, O_pad), jnp.float32).at[:, :O].set(lin_w.T)
  lin_w_parts = jnp.stack([w_pad[:H], w_pad[H:]])           # (2, H, O_pad)
  lin_b_pad = jnp.zeros((1, O_pad), jnp.float32).at[0, :O].set(lin_b)
  return {"embedding": emb, "encoder": enc, "decoder": dec,
          "lin_w": lin_w_parts.astype(jnp.bfloat16), "lin_b": lin_b_pad}


# ----------------------------------------------------------------------------
if __name__ == "__main__":
  cfg = dict(vocab_len=50, embed_size=32, lstm_hidden=32, lstm_layers=1,
             label_number=5, lstm_dropout=0.0)
  B, T = 2, 8

  key = jax.random.PRNGKey(0)
  params = make_params(key, cfg)

  key_src = jax.random.fold_in(key, 123)
  src = jax.random.randint(key_src, (B, T), 0, cfg["vocab_len"], jnp.int32)
  src_len = jnp.array([8, 5], dtype=jnp.int32)   # sorted descending (packed)

  feats = bilstm_crf_forward(src, src_len, params, cfg)
  feats = jax.block_until_ready(feats)

  ref = _forward_ref(src, src_len, params, cfg)
  assert feats.shape == (B, T, cfg["label_number"] + 2)
  max_diff = float(jnp.max(jnp.abs(feats - ref)))
  assert jnp.allclose(feats, ref, atol=2e-2, rtol=2e-2), (
      f"mismatch vs reference, max abs diff {max_diff}")

  print("KERNEL_OK")
</pallas_src>

<mosaic_0001>
module attributes {stable_mosaic.version = 11 : i64} {
  func.func @_proj_kernel(%arg0: i32, %arg1: i32, %arg2: memref<1x16x32xf32, #tpu.memory_space<vmem>>, %arg3: memref<1x32x256xbf16, #tpu.memory_space<vmem>>, %arg4: memref<1x256xf32, #tpu.memory_space<vmem>>, %arg5: memref<16x256xf32, #tpu.memory_space<vmem>>) attributes {dimension_semantics = [#tpu.dimension_semantics<parallel>, #tpu.dimension_semantics<arbitrary>], iteration_bounds = array<i64: 1, 1>, scalar_prefetch = 0 : i64, scratch_operands = 0 : i64, tpu.core_type = #tpu.core_type<tc>, window_params = [{transform_indices = @transform_0, window_bounds = array<i64: 1, 16, 32>}, {transform_indices = @transform_1, window_bounds = array<i64: 1, 32, 256>}, {pipeline_mode = #tpu.pipeline_mode<synchronous>, transform_indices = @transform_2, window_bounds = array<i64: 1, 256>}, {transform_indices = @transform_3, window_bounds = array<i64: 16, 256>}]} {
    %c0_i32 = arith.constant 0 : i32
    %0 = arith.cmpi eq, %arg1, %c0_i32 : i32
    %1 = arith.extui %0 : i1 to i32
    %c0_i32_0 = arith.constant 0 : i32
    %2 = arith.cmpi ne, %1, %c0_i32_0 : i32
    scf.if %2 {
      %c0_10 = arith.constant 0 : index
      %c0_11 = arith.constant 0 : index
      %12 = vector.load %arg4[%c0_10, %c0_11] : memref<1x256xf32, #tpu.memory_space<vmem>>, vector<1x256xf32>
      %13 = vector.shape_cast %12 : vector<1x256xf32> to vector<1x256xf32>
      %14 = vector.broadcast %13 : vector<1x256xf32> to vector<16x256xf32>
      %c0_12 = arith.constant 0 : index
      %c0_13 = arith.constant 0 : index
      %15 = vector.load %arg5[%c0_12, %c0_13] : memref<16x256xf32, #tpu.memory_space<vmem>>, vector<16x256xf32>
      tpu.vector_store %arg5[%c0_12, %c0_13], %14 {strides = array<i32>} : memref<16x256xf32, #tpu.memory_space<vmem>>, vector<16x256xf32>,
    } else {
    }
    %c0 = arith.constant 0 : index
    %c0_1 = arith.constant 0 : index
    %3 = vector.load %arg5[%c0, %c0_1] : memref<16x256xf32, #tpu.memory_space<vmem>>, vector<16x256xf32>
    %c0_2 = arith.constant 0 : index
    %c0_3 = arith.constant 0 : index
    %c0_4 = arith.constant 0 : index
    %4 = vector.load %arg2[%c0_2, %c0_3, %c0_4] : memref<1x16x32xf32, #tpu.memory_space<vmem>>, vector<1x16x32xf32>
    %5 = vector.shape_cast %4 : vector<1x16x32xf32> to vector<16x32xf32>
    %6 = arith.truncf %5 : vector<16x32xf32> to vector<16x32xbf16>
    %c0_5 = arith.constant 0 : index
    %c0_6 = arith.constant 0 : index
    %c0_7 = arith.constant 0 : index
    %7 = vector.load %arg3[%c0_5, %c0_6, %c0_7] : memref<1x32x256xbf16, #tpu.memory_space<vmem>>, vector<1x32x256xbf16>
    %8 = vector.shape_cast %7 : vector<1x32x256xbf16> to vector<32x256xbf16>
    %cst = arith.constant dense<0.000000e+00> : vector<16x256xf32>
    %9 = tpu.matmul %6, %8, %cst {dimension_numbers = #tpu.dot_dimension_numbers<[1], [0], [0], [1], [0, 0, 1, 1], [], []>} : vector<16x32xbf16>, vector<32x256xbf16>, vector<16x256xf32> -> vector<16x256xf32>
    %10 = arith.addf %3, %9 : vector<16x256xf32>
    %c0_8 = arith.constant 0 : index
    %c0_9 = arith.constant 0 : index
    %11 = vector.load %arg5[%c0_8, %c0_9] : memref<16x256xf32, #tpu.memory_space<vmem>>, vector<16x256xf32>
    tpu.vector_store %arg5[%c0_8, %c0_9], %10 {strides = array<i32>} : memref<16x256xf32, #tpu.memory_space<vmem>>, vector<16x256xf32>,
    return
  }
  func.func @transform_0(%arg0: i32, %arg1: i32) -> (i32, i32, i32) {
    %c0_i32 = arith.constant 0 : i32
    %c0_i32_0 = arith.constant 0 : i32
    return %arg1, %arg0, %c0_i32 : i32, i32, i32
  }
  func.func @transform_1(%arg0: i32, %arg1: i32) -> (i32, i32, i32) {
    %c0_i32 = arith.constant 0 : i32
    %c0_i32_0 = arith.constant 0 : i32
    %c0_i32_1 = arith.constant 0 : i32
    return %arg1, %c0_i32, %c0_i32_0 : i32, i32, i32
  }
  func.func @transform_2(%arg0: i32, %arg1: i32) -> (i32, i32) {
    %c0_i32 = arith.constant 0 : i32
    %c0_i32_0 = arith.constant 0 : i32
    %c0_i32_1 = arith.constant 0 : i32
    return %c0_i32, %c0_i32_0 : i32, i32
  }
  func.func @transform_3(%arg0: i32, %arg1: i32) -> (i32, i32) {
    %c0_i32 = arith.constant 0 : i32
    %c0_i32_0 = arith.constant 0 : i32
    return %arg0, %c0_i32 : i32, i32
  }
}

</mosaic_0001>

<llo_original>
// kernel: tpu_custom_call.1
$region0: #{tpu_custom_call.1}
  #allocation0 [shape = 'u32[]', space=smem, size = 0x4, offset = 0x4, fixed_abs, tag = 'smem constant byte address 0x4 - core index']
  #allocation1 [shape = 'u32[144,128]{1,0:T(1,128)}', space=vmem, size = 0x12000, scoped, tag = 'internal scratch']
  %s0 = inlined_call_operand.hbm [shape: f32[1,16,32], index: 0, kind: input, shape index: {}]
  %s1 = inlined_call_operand.hbm [shape: bf16[1,32,256], index: 1, kind: input, shape index: {}]
  %s2 = inlined_call_operand.vmem [shape: f32[1,256], index: 2, kind: input, shape index: {}]
  %s3 = inlined_call_operand.hbm [shape: f32[16,256], index: 3, kind: output, shape index: {}]
  %s4 = sld [smem:[#allocation0]]
  $region34: #{tpu_custom_call.1} parent=0
    _
  %s6 = ssub.s32 1, %s4
  %s7 = scalar_select 0, %s6, %s4
  $region1: #{tpu_custom_call.1} parent=0
    #allocation2 [shape = 'u8[8192]{0}', space=vmem, size = 0x2000, scoped, tag = 'input window, operand 0, single buffered']
    #allocation3 [shape = 's32[1]{0}', space=sflag, size = 0x4, scoped, tag = 'scoped memory for tpu_custom_call.1']
    #allocation4 [shape = 's32[1]{0}', space=sflag, size = 0x4, scoped, tag = 'scoped memory for tpu_custom_call.1']
    #allocation5 [shape = 'u8[16384]{0}', space=vmem, size = 0x4000, scoped, tag = 'input window, operand 1, single buffered']
    #allocation6 [shape = 's32[1]{0}', space=sflag, size = 0x4, scoped, tag = 'scoped memory for tpu_custom_call.1']
    #allocation7 [shape = 'u8[16384]{0}', space=vmem, size = 0x4000, scoped, tag = 'output window, operand 0, single buffered']
    %8 = vsyncpa [#allocation3], 0
    %9 = vsyncpa [#allocation6], 0
    %10 = vsyncpa [#allocation4], 0
    // Predicated region
    $region2: #{tpu_custom_call.1} parent=1 // pred_check
      _
    $region3: #{tpu_custom_call.1} parent=1 // pred_check_branch
      %12 = sbr.rel (0) target = $region5
    $region4: #{tpu_custom_call.1} parent=1 // pred_region
      %s14 = ssub.s32 256, 256
      %15 = vsyncadd [#allocation3], %s14
      %s16 = sshll.u32 [#allocation2], 4
      %s17 = int_to_ptr.vmem [resolvable:$true] %s16
      %22 = dma.hbm_to_vmem [thread:$0]  %s0, 256, %s17, [#allocation3], 128, 128, 8
    $region5: #{tpu_custom_call.1} parent=1 // pred_fallthru
      _
    // Predicated region
    $region6: #{tpu_custom_call.1} parent=1 // pred_check
      _
    $region7: #{tpu_custom_call.1} parent=1 // pred_check_branch
      %24 = sbr.rel (0) target = $region9
    $region8: #{tpu_custom_call.1} parent=1 // pred_region
      %s26 = ssub.s32 512, 512
      %27 = vsyncadd [#allocation6], %s26
      %s28 = sshll.u32 [#allocation5], 4
      %s29 = int_to_ptr.vmem [resolvable:$true] %s28
      %34 = dma.hbm_to_vmem [thread:$0]  %s1, 512, %s29, [#allocation6], 128, 128, 8
    $region9: #{tpu_custom_call.1} parent=1 // pred_fallthru
      _
    // Predicated region
    $region10: #{tpu_custom_call.1} parent=1 // pred_check
      _
    $region11: #{tpu_custom_call.1} parent=1 // pred_check_branch
      %36 = sbr.rel (0) target = $region13
    $region12: #{tpu_custom_call.1} parent=1 // pred_region
      _
    $region13: #{tpu_custom_call.1} parent=1 // pred_fallthru
      _
    // Predicated region
    $region14: #{tpu_custom_call.1} parent=1 // pred_check
      _
    $region15: #{tpu_custom_call.1} parent=1 // pred_check_branch
      %38 = sbr.rel (0) target = $region17
    $region16: #{tpu_custom_call.1} parent=1 // pred_region
      %39 = dma.done [#allocation3], 256
    $region17: #{tpu_custom_call.1} parent=1 // pred_fallthru
      _
    // Predicated region
    $region18: #{tpu_custom_call.1} parent=1 // pred_check
      _
    $region19: #{tpu_custom_call.1} parent=1 // pred_check_branch
      %41 = sbr.rel (0) target = $region21
    $region20: #{tpu_custom_call.1} parent=1 // pred_region
      %42 = dma.done [#allocation6], 512
    $region21: #{tpu_custom_call.1} parent=1 // pred_fallthru
      _
    %p44 = scmp.eq.s32.totalorder 0, 0
    // Predicated region
    $region22: #{tpu_custom_call.1} parent=1 // pred_check
      %p45 = pneg %p44
    $region23: #{tpu_custom_call.1} parent=1 // pred_check_branch
      %47 = sbr.rel (%p45) target = $region25
    $region24: #{tpu_custom_call.1} parent=1 // pred_region
      %v48 = vld [vmem:[%s2] sm:$0x3]
      %v50 = vlaneseq
      %v51 = vshrl.u32 %v50, 7
      %v52 = vsub.s32 0, %v51
      %v53 = vrot.slane %v48, %v52
      %v54 = vlaneseq
      %v55 = vshrl.u32 %v54, 7
      %v56 = vsub.s32 1, %v55
      %v57 = vrot.slane %v48, %v56
      %60 = vst [vmem:[#allocation7] sm:$0xff] %v53
      %61 = vst [vmem:[#allocation7 + $0x8] sm:$0xff] %v57
      %62 = vst [vmem:[#allocation7 + $0x10] sm:$0xff] %v53
      %63 = vst [vmem:[#allocation7 + $0x18] sm:$0xff] %v57
    $region25: #{tpu_custom_call.1} parent=1 // pred_fallthru
      _
    %v64 = vld [vmem:[#allocation7] sm:$0xff]
    %v65 = vld [vmem:[#allocation7 + $0x8] sm:$0xff]
    %v66 = vld [vmem:[#allocation7 + $0x10] sm:$0xff]
    %v67 = vld [vmem:[#allocation7 + $0x18] sm:$0xff]
    %v68 = vld [vmem:[#allocation2] sm:$0xff]
    %v69 = vld [vmem:[#allocation2 + $0x8] sm:$0xff]
    %v70 = vpack.c.bf16 %v69, %v68
    %v71 = vld [vmem:[#allocation5] sm:$0xff]
    %v72 = vld [vmem:[#allocation5 + $0x8] sm:$0xff]
    %v73 = vld [vmem:[#allocation5 + $0x10] sm:$0xff]
    %v74 = vld [vmem:[#allocation5 + $0x18] sm:$0xff]
    %v79 = vunpack.c.l.b16 %v71
    %v80 = vunpack.c.h.b16 %v71
    %v81 = vunpack.c.l.b16 %v72
    %v82 = vunpack.c.h.b16 %v72
    %v83 = vunpack.c.l.b16 %v73
    %v84 = vunpack.c.h.b16 %v73
    %v85 = vunpack.c.l.b16 %v74
    %v86 = vunpack.c.h.b16 %v74
    %v87 = vpack.c.b16 %v81, %v79
    %v88 = vpack.c.b16 %v82, %v80
    %v89 = vpack.c.b16 %v85, %v83
    %v90 = vpack.c.b16 %v86, %v84
    %vm95 = vcmask 261120
    %v97 = vsel %vm95, %v70, 0
    %99 = vmatprep.subr.bf16.mxu0 %v88
    %100 = vmatpush1.bf16.msra.mxu0 %v87
    %101 = vmatprep.subr.bf16.mxu0 %v90
    %102 = vmatpush1.bf16.msra.mxu0 %v89
    %103 = vmatprep.subr.bf16.mxu0 0
    %104 = vmatpush1.bf16.msra.mxu0 0
    %105 = vmatprep.subr.bf16.mxu0 0
    %106 = vmatpush1.bf16.msra.mxu0 0
    %107 = vmatprep.subr.bf16.mxu0 0
    %108 = vmatpush1.bf16.msra.mxu0 0
    %109 = vmatprep.subr.bf16.mxu0 0
    %110 = vmatpush1.bf16.msra.mxu0 0
    %111 = vmatprep.subr.bf16.mxu0 0
    %112 = vmatpush1.bf16.msra.mxu0 0
    %113 = vmatprep.subr.bf16.mxu0 0
    %114 = vmatpush1.bf16.msra.mxu0 0
    %115 = vmatprep.subr.bf16.mxu0 0
    %116 = vmatpush1.bf16.msra.mxu0 0
    %117 = vmatprep.subr.bf16.mxu0 0
    %118 = vmatpush1.bf16.msra.mxu0 0
    %119 = vmatprep.subr.bf16.mxu0 0
    %120 = vmatpush1.bf16.msra.mxu0 0
    %121 = vmatprep.subr.bf16.mxu0 0
    %122 = vmatpush1.bf16.msra.mxu0 0
    %123 = vmatprep.subr.bf16.mxu0 0
    %124 = vmatpush1.bf16.msra.mxu0 0
    %125 = vmatprep.subr.bf16.mxu0 0
    %126 = vmatpush1.bf16.msra.mxu0 0
    %127 = vmatprep.subr.bf16.mxu0 0
    %128 = vmatpush1.bf16.msra.mxu0 0
    %129 = vmatprep.subr.bf16.mxu0 0
    %130 = vmatpush1.bf16.msra.mxu0 0
    %131 = vmatprep.mubr.bf16.mxu0 0
    %132 = vmatmul.mubr.bf16.gmra.mrb[0].mxu0 %v97
    %v133 = vpop.f32.mrb[0].mxu0
    %v134 = vadd.f32 0.0, %v133
    %v135 = vpop.f32.mrb[0].mxu0
    %v136 = vadd.f32 0.0, %v135
    %v137 = vpop.f32.mrb[0].mxu0
    %v138 = vadd.f32 0.0, %v137
    %v139 = vpop.f32.mrb[0].mxu0
    %v140 = vadd.f32 0.0, %v139
    %141 = vdwg.mxu0
    %v142 = vadd.f32 %v64, %v134
    %v143 = vadd.f32 %v65, %v136
    %v144 = vadd.f32 %v66, %v138
    %v145 = vadd.f32 %v67, %v140
    %146 = vst [vmem:[#allocation7] sm:$0xff] %v142
    %147 = vst [vmem:[#allocation7 + $0x8] sm:$0xff] %v143
    %148 = vst [vmem:[#allocation7 + $0x10] sm:$0xff] %v144
    %149 = vst [vmem:[#allocation7 + $0x18] sm:$0xff] %v145
    // Predicated region
    $region26: #{tpu_custom_call.1} parent=1 // pred_check
      _
    $region27: #{tpu_custom_call.1} parent=1 // pred_check_branch
      %151 = sbr.rel (0) target = $region29
    $region28: #{tpu_custom_call.1} parent=1 // pred_region
      %s153 = ssub.s32 512, 512
      %154 = vsyncadd [#allocation4], %s153
      %s155 = sshll.u32 [#allocation7], 4
      %s156 = int_to_ptr.vmem [resolvable:$true] %s155
      %161 = dma.vmem_to_hbm [thread:$0]  %s156, 512, %s3, [#allocation4], 256, 256, 16
    $region29: #{tpu_custom_call.1} parent=1 // pred_fallthru
      _
    // Predicated region
    $region30: #{tpu_custom_call.1} parent=1 // pred_check
      _
    $region31: #{tpu_custom_call.1} parent=1 // pred_check_branch
      %163 = sbr.rel (0) target = $region33
    $region32: #{tpu_custom_call.1} parent=1 // pred_region
      %164 = dma.done [#allocation4], 512
    $region33: #{tpu_custom_call.1} parent=1 // pred_fallthru
      _
    %165 = vsyncpa [#allocation3], 1
    %166 = vsyncpa [#allocation6], 1
    %167 = vsyncpa [#allocation4], 1

</llo_original>
